<compile_context>
chip_gen: v7x
topology: tpu7x:2x2x1
jax: 0.10.0
libtpu: 0.0.40
codegen_flags: <defaults>
</compile_context>

<pallas_src>
import jax
import jax.numpy as jnp
from jax.experimental import pallas as pl
from jax.experimental.pallas import tpu as pltpu


# ----------------------- per-layer GCN kernel (adj streamed) ------------------------
# Computes relu( D^-1/2 A D^-1/2 @ h @ W + b ) with A streamed in (tm, tk) bf16 tiles.
def _gcn_layer_kernel(adj_ref, h_ref, dcol_ref, drow_ref, w_ref, b_ref,
                      out_ref, acc_ref):
    k = pl.program_id(1)

    @pl.when(k == 0)
    def _():
        acc_ref[...] = jnp.zeros_like(acc_ref)

    # Right normalization (D^-1/2 h) in f32 on the VPU; bf16 only feeds the MXU.
    h_scaled = (dcol_ref[...] * h_ref[...]).astype(jnp.bfloat16)
    acc_ref[...] += jnp.dot(adj_ref[...], h_scaled,
                            preferred_element_type=jnp.float32)

    @pl.when(k == pl.num_programs(1) - 1)
    def _():
        # (A @ D^-1/2 h) @ W  ==  A @ D^-1/2 (h @ W); W applied once per row tile.
        z = jnp.dot(acc_ref[...], w_ref[...], preferred_element_type=jnp.float32)
        z = drow_ref[...] * z + b_ref[...]        # left norm + bias
        out_ref[...] = jnp.maximum(z, 0.0)        # ReLU (dropout: eval / identity)


def _gcn_layer(adj_bf16, dinv_col, h, w, b, *, tm, tk):
    n_p = adj_bf16.shape[0]
    f_in = h.shape[1]
    f_out = w.shape[1]
    grid = (n_p // tm, n_p // tk)

    flops = 2 * n_p * n_p * f_in + 2 * n_p * f_in * f_out
    bytes_accessed = n_p * n_p * 2 + n_p * (f_in + f_out) * 4 + n_p * 8

    return pl.pallas_call(
        _gcn_layer_kernel,
        out_shape=jax.ShapeDtypeStruct((n_p, f_out), jnp.float32),
        grid_spec=pltpu.PrefetchScalarGridSpec(
            num_scalar_prefetch=0,
            grid=grid,
            in_specs=[
                pl.BlockSpec((tm, tk), lambda i, k: (i, k)),       # adj tile (bf16, streamed)
                pl.BlockSpec((tk, f_in), lambda i, k: (k, 0)),     # h column block (f32)
                pl.BlockSpec((tk, 1), lambda i, k: (k, 0)),        # dinv (columns)
                pl.BlockSpec((tm, 1), lambda i, k: (i, 0)),        # dinv (rows)
                pl.BlockSpec((f_in, f_out), lambda i, k: (0, 0)),  # W (resident)
                pl.BlockSpec((1, f_out), lambda i, k: (0, 0)),     # b (resident)
            ],
            out_specs=pl.BlockSpec((tm, f_out), lambda i, k: (i, 0)),
            scratch_shapes=[pltpu.VMEM((tm, f_in), jnp.float32)],
        ),
        compiler_params=pltpu.CompilerParams(
            dimension_semantics=("parallel", "arbitrary"),
            vmem_limit_bytes=32 * 1024 * 1024,
        ),
        cost_estimate=pl.CostEstimate(
            flops=int(flops), transcendentals=0, bytes_accessed=int(bytes_accessed)),
    )(adj_bf16, h, dinv_col, dinv_col, w, b)


# -------------------- pooling + fc1 + fc2 + log_softmax kernel ----------------------
# Streams the (B, N) averaging matrix and node features over the node axis; the tiny
# (B, F) pooled accumulator lives in VMEM scratch.  FC1/FC2/log_softmax fused at the
# final reduction step.
def _head_kernel(pool_ref, h_ref, fw1_ref, fb1_ref, fw2_ref, fb2_ref,
                 emb_ref, out_ref, acc_ref):
    k = pl.program_id(0)

    @pl.when(k == 0)
    def _():
        acc_ref[...] = jnp.zeros_like(acc_ref)

    acc_ref[...] += jnp.dot(pool_ref[...], h_ref[...],
                            preferred_element_type=jnp.float32)

    @pl.when(k == pl.num_programs(0) - 1)
    def _():
        pooled = acc_ref[...]
        emb_ref[...] = pooled
        z = jnp.dot(pooled, fw1_ref[...], preferred_element_type=jnp.float32) + fb1_ref[...]
        z = jnp.dot(z, fw2_ref[...], preferred_element_type=jnp.float32) + fb2_ref[...]
        m = jnp.max(z, axis=1, keepdims=True)
        s = z - m
        lse = jnp.log(jnp.sum(jnp.exp(s), axis=1, keepdims=True))
        out_ref[...] = s - lse


def _head(pool, h, fw1, fb1, fw2, fb2, *, tk):
    num_graphs, n_p = pool.shape
    out_feats = h.shape[1]
    d_h = fw1.shape[1]
    d_out = fw2.shape[1]
    grid = (n_p // tk,)

    flops = 2 * num_graphs * n_p * out_feats \
        + 2 * num_graphs * out_feats * d_h + 2 * num_graphs * d_h * d_out
    bytes_accessed = n_p * (num_graphs + out_feats) * 4 \
        + (out_feats * d_h + d_h * d_out) * 4 + num_graphs * (out_feats + d_out) * 4

    return pl.pallas_call(
        _head_kernel,
        out_shape=(
            jax.ShapeDtypeStruct((num_graphs, out_feats), jnp.float32),
            jax.ShapeDtypeStruct((num_graphs, d_out), jnp.float32),
        ),
        grid_spec=pltpu.PrefetchScalarGridSpec(
            num_scalar_prefetch=0,
            grid=grid,
            in_specs=[
                pl.BlockSpec((num_graphs, tk), lambda k: (0, k)),   # pooling block (streamed)
                pl.BlockSpec((tk, out_feats), lambda k: (k, 0)),    # node features block
                pl.BlockSpec((out_feats, d_h), lambda k: (0, 0)),   # fc1 W (resident)
                pl.BlockSpec((1, d_h), lambda k: (0, 0)),           # fc1 b
                pl.BlockSpec((d_h, d_out), lambda k: (0, 0)),       # fc2 W
                pl.BlockSpec((1, d_out), lambda k: (0, 0)),         # fc2 b
            ],
            out_specs=(
                pl.BlockSpec((num_graphs, out_feats), lambda k: (0, 0)),
                pl.BlockSpec((num_graphs, d_out), lambda k: (0, 0)),
            ),
            scratch_shapes=[pltpu.VMEM((num_graphs, out_feats), jnp.float32)],
        ),
        compiler_params=pltpu.CompilerParams(
            dimension_semantics=("arbitrary",),
            vmem_limit_bytes=32 * 1024 * 1024,
        ),
        cost_estimate=pl.CostEstimate(
            flops=int(flops), transcendentals=2 * num_graphs * d_out,
            bytes_accessed=int(bytes_accessed)),
    )(pool, h, fw1, fb1, fw2, fb2)


# ------------------------------------ wrapper ----------------------------------------
def triple_gcn_net(x, edge_index, batch, num_graphs, params):
    """x: (N, in_feats) f32; edge_index: (2, E) i32 (src, dst); batch: (N,) i32."""
    n = x.shape[0]
    (w1, b1, w2, b2, w3, b3, fw1, fb1, fw2, fb2) = params

    # Pad node count so the adjacency tiles cleanly; padded nodes are isolated
    # (zero rows/cols, dinv = 0, excluded from pooling) so results are unchanged.
    n_p = max(128, ((n + 127) // 128) * 128)

    def _pick_tile(cap):
        t = cap
        while n_p % t:
            t //= 2
        return t

    tm = _pick_tile(256)   # row tile  ("parallel" axis; modest so it also fits v7x 64 MiB/TC)
    tk = _pick_tile(512)   # col tile  (reduction axis; big enough to amortize step overhead)

    src, dst = edge_index[0], edge_index[1]
    loops = jnp.arange(n, dtype=src.dtype)
    rows = jnp.concatenate([dst, loops])      # aggregate messages at the target node
    cols = jnp.concatenate([src, loops])      # (GCNConv convention); self-loops appended

    # Degrees of (A + I); duplicate edges accumulate, matching gcn_norm semantics.
    deg = jnp.zeros((n_p,), jnp.float32).at[rows].add(1.0)
    dinv = jnp.where(deg > 0, jax.lax.rsqrt(deg), 0.0)[:, None]        # (Np, 1) f32

    # Raw adjacency built directly in bf16 at padded size — the only O(N^2) array.
    adj = jnp.zeros((n_p, n_p), jnp.bfloat16).at[rows, cols].add(
        jnp.ones(rows.shape, jnp.bfloat16))

    x_p = jnp.pad(x.astype(jnp.float32), ((0, n_p - n), (0, 0)))

    # Three streamed GCN layers (dropout == identity in eval mode).
    h = _gcn_layer(adj, dinv, x_p, w1, b1, tm=tm, tk=tk)
    h = _gcn_layer(adj, dinv, h, w2, b2, tm=tm, tk=tk)
    h = _gcn_layer(adj, dinv, h, w3, b3, tm=tm, tk=tk)

    # scatter_mean as an averaging matrix (B, Np); padded nodes contribute nothing.
    batch_p = jnp.pad(batch, (0, n_p - n), constant_values=-1)
    onehot = (batch_p[None, :] ==
              jnp.arange(num_graphs, dtype=batch.dtype)[:, None]).astype(jnp.float32)
    pool = onehot / jnp.maximum(onehot.sum(axis=1, keepdims=True), 1.0)

    emb, logp = _head(pool, h, fw1, fb1, fw2, fb2, tk=tk)
    return emb, logp


# --------------------------------- param init ----------------------------------------
def init_params(key, in_feats, hid_feats, out_feats, d_h, d_out):
    ks = jax.random.split(key, 10)
    scale = 0.1

    def w(k, shape):
        return scale * jax.random.normal(k, shape, dtype=jnp.float32)

    # GCN weights stored as (in, out); fc weights as (in, out) (== W.T of nn.Linear).
    w1 = w(ks[0], (in_feats, hid_feats * 2));   b1 = w(ks[1], (1, hid_feats * 2))
    w2 = w(ks[2], (hid_feats * 2, hid_feats));  b2 = w(ks[3], (1, hid_feats))
    w3 = w(ks[4], (hid_feats, out_feats));      b3 = w(ks[5], (1, out_feats))
    fw1 = w(ks[6], (out_feats, d_h));           fb1 = w(ks[7], (1, d_h))
    fw2 = w(ks[8], (d_h, d_out));               fb2 = w(ks[9], (1, d_out))
    return (w1, b1, w2, b2, w3, b3, fw1, fb1, fw2, fb2)


# ----------------------------- pure-JAX reference ------------------------------------
def _reference_forward(x, edge_index, batch, num_graphs, params):
    n = x.shape[0]
    (w1, b1, w2, b2, w3, b3, fw1, fb1, fw2, fb2) = params
    a = jnp.zeros((n, n), jnp.float32).at[edge_index[1], edge_index[0]].add(1.0)
    a = a + jnp.eye(n, dtype=jnp.float32)
    deg = a.sum(axis=1)
    dinv = jnp.where(deg > 0, jax.lax.rsqrt(deg), 0.0)
    adj = dinv[:, None] * a * dinv[None, :]
    h = jnp.maximum(adj @ (x @ w1) + b1, 0.0)
    h = jnp.maximum(adj @ (h @ w2) + b2, 0.0)
    h = jnp.maximum(adj @ (h @ w3) + b3, 0.0)
    onehot = (batch[None, :] == jnp.arange(num_graphs)[:, None]).astype(jnp.float32)
    pool = onehot / jnp.maximum(onehot.sum(axis=1, keepdims=True), 1.0)
    emb = pool @ h
    z = emb @ fw1 + fb1
    z = z @ fw2 + fb2
    return emb, jax.nn.log_softmax(z, axis=1)


# --------------------------------------- main ----------------------------------------
if __name__ == "__main__":
    key = jax.random.PRNGKey(0)

    in_feats, hid_feats, out_feats, d_h, d_out = 16, 16, 32, 64, 4
    nodes_per_graph, num_graphs = 12, 2
    n = nodes_per_graph * num_graphs

    k_x, k_p = jax.random.split(key)
    x = jax.random.normal(k_x, (n, in_feats), dtype=jnp.float32)

    # Bidirectional chain edges within each graph.
    src, dst = [], []
    for g in range(num_graphs):
        base = g * nodes_per_graph
        for i in range(nodes_per_graph - 1):
            src += [base + i, base + i + 1]
            dst += [base + i + 1, base + i]
    edge_index = jnp.array([src, dst], dtype=jnp.int32)
    batch = jnp.repeat(jnp.arange(num_graphs, dtype=jnp.int32), nodes_per_graph)

    params = init_params(k_p, in_feats, hid_feats, out_feats, d_h, d_out)

    emb, logp = triple_gcn_net(x, edge_index, batch, num_graphs, params)
    jax.block_until_ready((emb, logp))

    assert emb.shape == (num_graphs, out_feats)
    assert logp.shape == (num_graphs, d_out)
    assert bool(jnp.all(jnp.isfinite(emb))) and bool(jnp.all(jnp.isfinite(logp)))
    # log_softmax rows must sum to ~1 in prob space.
    assert jnp.allclose(jnp.exp(logp).sum(axis=1), 1.0, atol=1e-5)

    # Cross-check against a pure-JAX f32 reference (bf16 feeds only the MXU operands).
    emb_ref, logp_ref = _reference_forward(x, edge_index, batch, num_graphs, params)
    assert jnp.allclose(emb, emb_ref, rtol=5e-2, atol=2e-3), \
        float(jnp.max(jnp.abs(emb - emb_ref)))
    assert jnp.allclose(logp, logp_ref, rtol=5e-2, atol=2e-3), \
        float(jnp.max(jnp.abs(logp - logp_ref)))

    print("KERNEL_OK")
</pallas_src>

<mosaic_0001>
module attributes {stable_mosaic.version = 11 : i64} {
  func.func @_gcn_layer_kernel(%arg0: i32, %arg1: i32, %arg2: memref<128x128xbf16, #tpu.memory_space<vmem>>, %arg3: memref<128x16xf32, #tpu.memory_space<vmem>>, %arg4: memref<128x1xf32, #tpu.memory_space<vmem>>, %arg5: memref<128x1xf32, #tpu.memory_space<vmem>>, %arg6: memref<16x32xf32, #tpu.memory_space<vmem>>, %arg7: memref<1x32xf32, #tpu.memory_space<vmem>>, %arg8: memref<128x32xf32, #tpu.memory_space<vmem>>, %arg9: memref<128x16xf32, #tpu.memory_space<vmem>>) attributes {dimension_semantics = [#tpu.dimension_semantics<parallel>, #tpu.dimension_semantics<arbitrary>], iteration_bounds = array<i64: 1, 1>, scalar_prefetch = 0 : i64, scratch_operands = 1 : i64, tpu.core_type = #tpu.core_type<tc>, window_params = [{transform_indices = @transform_0, window_bounds = array<i64: 128, 128>}, {transform_indices = @transform_1, window_bounds = array<i64: 128, 16>}, {transform_indices = @transform_2, window_bounds = array<i64: 128, 1>}, {transform_indices = @transform_3, window_bounds = array<i64: 128, 1>}, {pipeline_mode = #tpu.pipeline_mode<synchronous>, transform_indices = @transform_4, window_bounds = array<i64: 16, 32>}, {pipeline_mode = #tpu.pipeline_mode<synchronous>, transform_indices = @transform_5, window_bounds = array<i64: 1, 32>}, {transform_indices = @transform_6, window_bounds = array<i64: 128, 32>}]} {
    %c0_i32 = arith.constant 0 : i32
    %0 = arith.cmpi eq, %arg1, %c0_i32 : i32
    %1 = arith.extui %0 : i1 to i32
    %c0_i32_0 = arith.constant 0 : i32
    %2 = arith.cmpi ne, %1, %c0_i32_0 : i32
    scf.if %2 {
      %cst_12 = arith.constant 0.000000e+00 : f32
      %16 = vector.broadcast %cst_12 : f32 to vector<128x16xf32>
      %c0_13 = arith.constant 0 : index
      %c0_14 = arith.constant 0 : index
      %17 = vector.load %arg9[%c0_13, %c0_14] : memref<128x16xf32, #tpu.memory_space<vmem>>, vector<128x16xf32>
      tpu.vector_store %arg9[%c0_13, %c0_14], %16 {strides = array<i32>} : memref<128x16xf32, #tpu.memory_space<vmem>>, vector<128x16xf32>,
    } else {
    }
    %c0 = arith.constant 0 : index
    %c0_1 = arith.constant 0 : index
    %3 = vector.load %arg4[%c0, %c0_1] : memref<128x1xf32, #tpu.memory_space<vmem>>, vector<128x1xf32>
    %c0_2 = arith.constant 0 : index
    %c0_3 = arith.constant 0 : index
    %4 = vector.load %arg3[%c0_2, %c0_3] : memref<128x16xf32, #tpu.memory_space<vmem>>, vector<128x16xf32>
    %5 = vector.broadcast %3 : vector<128x1xf32> to vector<128x16xf32>
    %6 = arith.mulf %5, %4 : vector<128x16xf32>
    %7 = arith.truncf %6 : vector<128x16xf32> to vector<128x16xbf16>
    %c0_4 = arith.constant 0 : index
    %c0_5 = arith.constant 0 : index
    %8 = vector.load %arg9[%c0_4, %c0_5] : memref<128x16xf32, #tpu.memory_space<vmem>>, vector<128x16xf32>
    %c0_6 = arith.constant 0 : index
    %c0_7 = arith.constant 0 : index
    %9 = vector.load %arg2[%c0_6, %c0_7] : memref<128x128xbf16, #tpu.memory_space<vmem>>, vector<128x128xbf16>
    %cst = arith.constant dense<0.000000e+00> : vector<128x16xf32>
    %10 = tpu.matmul %9, %7, %cst {dimension_numbers = #tpu.dot_dimension_numbers<[1], [0], [0], [1], [0, 0, 1, 1], [], []>} : vector<128x128xbf16>, vector<128x16xbf16>, vector<128x16xf32> -> vector<128x16xf32>
    %11 = arith.addf %8, %10 : vector<128x16xf32>
    %c0_8 = arith.constant 0 : index
    %c0_9 = arith.constant 0 : index
    %12 = vector.load %arg9[%c0_8, %c0_9] : memref<128x16xf32, #tpu.memory_space<vmem>>, vector<128x16xf32>
    tpu.vector_store %arg9[%c0_8, %c0_9], %11 {strides = array<i32>} : memref<128x16xf32, #tpu.memory_space<vmem>>, vector<128x16xf32>,
    %c0_i32_10 = arith.constant 0 : i32
    %13 = arith.cmpi eq, %arg1, %c0_i32_10 : i32
    %14 = arith.extui %13 : i1 to i32
    %c0_i32_11 = arith.constant 0 : i32
    %15 = arith.cmpi ne, %14, %c0_i32_11 : i32
    scf.if %15 {
      %c0_12 = arith.constant 0 : index
      %c0_13 = arith.constant 0 : index
      %16 = vector.load %arg9[%c0_12, %c0_13] : memref<128x16xf32, #tpu.memory_space<vmem>>, vector<128x16xf32>
      %c0_14 = arith.constant 0 : index
      %c0_15 = arith.constant 0 : index
      %17 = vector.load %arg6[%c0_14, %c0_15] : memref<16x32xf32, #tpu.memory_space<vmem>>, vector<16x32xf32>
      %cst_16 = arith.constant dense<0.000000e+00> : vector<128x32xf32>
      %18 = tpu.matmul %16, %17, %cst_16 {dimension_numbers = #tpu.dot_dimension_numbers<[1], [0], [0], [1], [0, 0, 1, 1], [], []>} : vector<128x16xf32>, vector<16x32xf32>, vector<128x32xf32> -> vector<128x32xf32>
      %c0_17 = arith.constant 0 : index
      %c0_18 = arith.constant 0 : index
      %19 = vector.load %arg5[%c0_17, %c0_18] : memref<128x1xf32, #tpu.memory_space<vmem>>, vector<128x1xf32>
      %20 = vector.broadcast %19 : vector<128x1xf32> to vector<128x32xf32>
      %21 = arith.mulf %20, %18 : vector<128x32xf32>
      %c0_19 = arith.constant 0 : index
      %c0_20 = arith.constant 0 : index
      %22 = vector.load %arg7[%c0_19, %c0_20] : memref<1x32xf32, #tpu.memory_space<vmem>>, vector<1x32xf32>
      %23 = vector.broadcast %22 : vector<1x32xf32> to vector<128x32xf32>
      %24 = arith.addf %21, %23 : vector<128x32xf32>
      %cst_21 = arith.constant 0.000000e+00 : f32
      %25 = vector.broadcast %cst_21 : f32 to vector<128x32xf32>
      %26 = arith.maximumf %24, %25 : vector<128x32xf32>
      %c0_22 = arith.constant 0 : index
      %c0_23 = arith.constant 0 : index
      %27 = vector.load %arg8[%c0_22, %c0_23] : memref<128x32xf32, #tpu.memory_space<vmem>>, vector<128x32xf32>
      tpu.vector_store %arg8[%c0_22, %c0_23], %26 {strides = array<i32>} : memref<128x32xf32, #tpu.memory_space<vmem>>, vector<128x32xf32>,
    } else {
    }
    return
  }
  func.func @transform_0(%arg0: i32, %arg1: i32) -> (i32, i32) {
    %c0_i32 = arith.constant 0 : i32
    return %arg0, %arg1 : i32, i32
  }
  func.func @transform_1(%arg0: i32, %arg1: i32) -> (i32, i32) {
    %c0_i32 = arith.constant 0 : i32
    %c0_i32_0 = arith.constant 0 : i32
    return %arg1, %c0_i32 : i32, i32
  }
  func.func @transform_2(%arg0: i32, %arg1: i32) -> (i32, i32) {
    %c0_i32 = arith.constant 0 : i32
    %c0_i32_0 = arith.constant 0 : i32
    return %arg1, %c0_i32 : i32, i32
  }
  func.func @transform_3(%arg0: i32, %arg1: i32) -> (i32, i32) {
    %c0_i32 = arith.constant 0 : i32
    %c0_i32_0 = arith.constant 0 : i32
    return %arg0, %c0_i32 : i32, i32
  }
  func.func @transform_4(%arg0: i32, %arg1: i32) -> (i32, i32) {
    %c0_i32 = arith.constant 0 : i32
    %c0_i32_0 = arith.constant 0 : i32
    %c0_i32_1 = arith.constant 0 : i32
    return %c0_i32, %c0_i32_0 : i32, i32
  }
  func.func @transform_5(%arg0: i32, %arg1: i32) -> (i32, i32) {
    %c0_i32 = arith.constant 0 : i32
    %c0_i32_0 = arith.constant 0 : i32
    %c0_i32_1 = arith.constant 0 : i32
    return %c0_i32, %c0_i32_0 : i32, i32
  }
  func.func @transform_6(%arg0: i32, %arg1: i32) -> (i32, i32) {
    %c0_i32 = arith.constant 0 : i32
    %c0_i32_0 = arith.constant 0 : i32
    return %arg0, %c0_i32 : i32, i32
  }
}

</mosaic_0001>

<llo_original>
// kernel: tpu_custom_call.1
$region0: #{tpu_custom_call.1}
  #allocation0 [shape = 'u32[]', space=smem, size = 0x4, offset = 0x4, fixed_abs, tag = 'smem constant byte address 0x4 - core index']
  #allocation1 [shape = 'u32[144,128]{1,0:T(1,128)}', space=vmem, size = 0x12000, scoped, tag = 'internal scratch']
  #allocation2 [shape = 'f32[128,16]{1,0:T(8,128)}', space=vmem, size = 0x10000, scoped, tag = 'scratch operand']
  %s0 = inlined_call_operand.vmem [shape: bf16[128,128], index: 0, kind: input, shape index: {}]
  %s1 = inlined_call_operand.vmem [shape: f32[128,16], index: 1, kind: input, shape index: {}]
  %s2 = inlined_call_operand.vmem [shape: f32[128,1], index: 2, kind: input, shape index: {}]
  %s3 = inlined_call_operand.vmem [shape: f32[128,1], index: 3, kind: input, shape index: {}]
  %s4 = inlined_call_operand.vmem [shape: f32[16,32], index: 4, kind: input, shape index: {}]
  %s5 = inlined_call_operand.vmem [shape: f32[1,32], index: 5, kind: input, shape index: {}]
  %s6 = inlined_call_operand.vmem [shape: f32[128,32], index: 6, kind: output, shape index: {}]
  %s7 = sld [smem:[#allocation0]]
  $region42: #{tpu_custom_call.1} parent=0
    _
  %s9 = ssub.s32 1, %s7
  %s10 = scalar_select 0, %s9, %s7
  // Predicated region
  $region2: #{tpu_custom_call.1} parent=0 // pred_check
    _
  $region3: #{tpu_custom_call.1} parent=0 // pred_check_branch
    %12 = sbr.rel (0) target = $region5
  $region4: #{tpu_custom_call.1} parent=0 // pred_region
    _
  $region5: #{tpu_custom_call.1} parent=0 // pred_fallthru
    _
  // Predicated region
  $region6: #{tpu_custom_call.1} parent=0 // pred_check
    _
  $region7: #{tpu_custom_call.1} parent=0 // pred_check_branch
    %14 = sbr.rel (0) target = $region9
  $region8: #{tpu_custom_call.1} parent=0 // pred_region
    _
  $region9: #{tpu_custom_call.1} parent=0 // pred_fallthru
    _
  // Predicated region
  $region10: #{tpu_custom_call.1} parent=0 // pred_check
    _
  $region11: #{tpu_custom_call.1} parent=0 // pred_check_branch
    %16 = sbr.rel (0) target = $region13
  $region12: #{tpu_custom_call.1} parent=0 // pred_region
    _
  $region13: #{tpu_custom_call.1} parent=0 // pred_fallthru
    _
  // Predicated region
  $region14: #{tpu_custom_call.1} parent=0 // pred_check
    _
  $region15: #{tpu_custom_call.1} parent=0 // pred_check_branch
    %18 = sbr.rel (0) target = $region17
  $region16: #{tpu_custom_call.1} parent=0 // pred_region
    _
  $region17: #{tpu_custom_call.1} parent=0 // pred_fallthru
    _
  // Predicated region
  $region18: #{tpu_custom_call.1} parent=0 // pred_check
    _
  $region19: #{tpu_custom_call.1} parent=0 // pred_check_branch
    %20 = sbr.rel (0) target = $region21
  $region20: #{tpu_custom_call.1} parent=0 // pred_region
    _
  $region21: #{tpu_custom_call.1} parent=0 // pred_fallthru
    _
  // Predicated region
  $region22: #{tpu_custom_call.1} parent=0 // pred_check
    _
  $region23: #{tpu_custom_call.1} parent=0 // pred_check_branch
    %22 = sbr.rel (0) target = $region25
  $region24: #{tpu_custom_call.1} parent=0 // pred_region
    _
  $region25: #{tpu_custom_call.1} parent=0 // pred_fallthru
    _
  %p24 = scmp.eq.s32.totalorder 0, 0
  // Predicated region
  $region26: #{tpu_custom_call.1} parent=0 // pred_check
    %p25 = pneg %p24
  $region27: #{tpu_custom_call.1} parent=0 // pred_check_branch
    %27 = sbr.rel (%p25) target = $region29
  $region28: #{tpu_custom_call.1} parent=0 // pred_region
    %vm28 = vcmask 130048
    %29 = vst.msk [vmem:[#allocation2] sm:$0xff] %vm28, 0.0
    %30 = vst.msk [vmem:[#allocation2 + $0x8] sm:$0xff] %vm28, 0.0
    %31 = vst.msk [vmem:[#allocation2 + $0x10] sm:$0xff] %vm28, 0.0
    %32 = vst.msk [vmem:[#allocation2 + $0x18] sm:$0xff] %vm28, 0.0
    %33 = vst.msk [vmem:[#allocation2 + $0x20] sm:$0xff] %vm28, 0.0
    %34 = vst.msk [vmem:[#allocation2 + $0x28] sm:$0xff] %vm28, 0.0
    %35 = vst.msk [vmem:[#allocation2 + $0x30] sm:$0xff] %vm28, 0.0
    %36 = vst.msk [vmem:[#allocation2 + $0x38] sm:$0xff] %vm28, 0.0
    %37 = vst.msk [vmem:[#allocation2 + $0x40] sm:$0xff] %vm28, 0.0
    %38 = vst.msk [vmem:[#allocation2 + $0x48] sm:$0xff] %vm28, 0.0
    %39 = vst.msk [vmem:[#allocation2 + $0x50] sm:$0xff] %vm28, 0.0
    %40 = vst.msk [vmem:[#allocation2 + $0x58] sm:$0xff] %vm28, 0.0
    %41 = vst.msk [vmem:[#allocation2 + $0x60] sm:$0xff] %vm28, 0.0
    %42 = vst.msk [vmem:[#allocation2 + $0x68] sm:$0xff] %vm28, 0.0
    %43 = vst.msk [vmem:[#allocation2 + $0x70] sm:$0xff] %vm28, 0.0
    %44 = vst.msk [vmem:[#allocation2 + $0x78] sm:$0xff] %vm28, 0.0
  $region29: #{tpu_custom_call.1} parent=0 // pred_fallthru
    _
  %v45 = vld [vmem:[%s2] sm:$0xff]
  %v46 = vld [vmem:[%s2 + $0x8] sm:$0xff]
  %v47 = vld [vmem:[%s2 + $0x10] sm:$0xff]
  %v48 = vld [vmem:[%s2 + $0x18] sm:$0xff]
  %v49 = vld [vmem:[%s2 + $0x20] sm:$0xff]
  %v50 = vld [vmem:[%s2 + $0x28] sm:$0xff]
  %v51 = vld [vmem:[%s2 + $0x30] sm:$0xff]
  %v52 = vld [vmem:[%s2 + $0x38] sm:$0xff]
  %v53 = vld [vmem:[%s2 + $0x40] sm:$0xff]
  %v54 = vld [vmem:[%s2 + $0x48] sm:$0xff]
  %v55 = vld [vmem:[%s2 + $0x50] sm:$0xff]
  %v56 = vld [vmem:[%s2 + $0x58] sm:$0xff]
  %v57 = vld [vmem:[%s2 + $0x60] sm:$0xff]
  %v58 = vld [vmem:[%s2 + $0x68] sm:$0xff]
  %v59 = vld [vmem:[%s2 + $0x70] sm:$0xff]
  %v60 = vld [vmem:[%s2 + $0x78] sm:$0xff]
  %v61 = vld [vmem:[%s1] sm:$0xff]
  %v62 = vld [vmem:[%s1 + $0x8] sm:$0xff]
  %v63 = vld [vmem:[%s1 + $0x10] sm:$0xff]
  %v64 = vld [vmem:[%s1 + $0x18] sm:$0xff]
  %v65 = vld [vmem:[%s1 + $0x20] sm:$0xff]
  %v66 = vld [vmem:[%s1 + $0x28] sm:$0xff]
  %v67 = vld [vmem:[%s1 + $0x30] sm:$0xff]
  %v68 = vld [vmem:[%s1 + $0x38] sm:$0xff]
  %v69 = vld [vmem:[%s1 + $0x40] sm:$0xff]
  %v70 = vld [vmem:[%s1 + $0x48] sm:$0xff]
  %v71 = vld [vmem:[%s1 + $0x50] sm:$0xff]
  %v72 = vld [vmem:[%s1 + $0x58] sm:$0xff]
  %v73 = vld [vmem:[%s1 + $0x60] sm:$0xff]
  %v74 = vld [vmem:[%s1 + $0x68] sm:$0xff]
  %v75 = vld [vmem:[%s1 + $0x70] sm:$0xff]
  %v76 = vld [vmem:[%s1 + $0x78] sm:$0xff]
  %78 = vset.pattern.permute.xlu0 0
  %79 = vperm.xlu0 %78, %v45
  %v80 = vpop.permute.xlu0 %79
  %83 = vset.pattern.permute.xlu0 0
  %84 = vperm.xlu0 %83, %v46
  %v85 = vpop.permute.xlu0 %84
  %88 = vset.pattern.permute.xlu0 0
  %89 = vperm.xlu0 %88, %v47
  %v90 = vpop.permute.xlu0 %89
  %93 = vset.pattern.permute.xlu0 0
  %94 = vperm.xlu0 %93, %v48
  %v95 = vpop.permute.xlu0 %94
  %98 = vset.pattern.permute.xlu0 0
  %99 = vperm.xlu0 %98, %v49
  %v100 = vpop.permute.xlu0 %99
  %103 = vset.pattern.permute.xlu0 0
  %104 = vperm.xlu0 %103, %v50
  %v105 = vpop.permute.xlu0 %104
  %108 = vset.pattern.permute.xlu0 0
  %109 = vperm.xlu0 %108, %v51
  %v110 = vpop.permute.xlu0 %109
  %113 = vset.pattern.permute.xlu0 0
  %114 = vperm.xlu0 %113, %v52
  %v115 = vpop.permute.xlu0 %114
  %118 = vset.pattern.permute.xlu0 0
  %119 = vperm.xlu0 %118, %v53
  %v120 = vpop.permute.xlu0 %119
  %123 = vset.pattern.permute.xlu0 0
  %124 = vperm.xlu0 %123, %v54
  %v125 = vpop.permute.xlu0 %124
  %128 = vset.pattern.permute.xlu0 0
  %129 = vperm.xlu0 %128, %v55
  %v130 = vpop.permute.xlu0 %129
  %133 = vset.pattern.permute.xlu0 0
  %134 = vperm.xlu0 %133, %v56
  %v135 = vpop.permute.xlu0 %134
  %138 = vset.pattern.permute.xlu0 0
  %139 = vperm.xlu0 %138, %v57
  %v140 = vpop.permute.xlu0 %139
  %143 = vset.pattern.permute.xlu0 0
  %144 = vperm.xlu0 %143, %v58
  %v145 = vpop.permute.xlu0 %144
  %148 = vset.pattern.permute.xlu0 0
  %149 = vperm.xlu0 %148, %v59
  %v150 = vpop.permute.xlu0 %149
  %153 = vset.pattern.permute.xlu0 0
  %154 = vperm.xlu0 %153, %v60
  %v155 = vpop.permute.xlu0 %154
  %v157 = vmul.f32 %v80, %v61
  %v158 = vmul.f32 %v85, %v62
  %v159 = vmul.f32 %v90, %v63
  %v160 = vmul.f32 %v95, %v64
  %v161 = vmul.f32 %v100, %v65
  %v162 = vmul.f32 %v105, %v66
  %v163 = vmul.f32 %v110, %v67
  %v164 = vmul.f32 %v115, %v68
  %v165 = vmul.f32 %v120, %v69
  %v166 = vmul.f32 %v125, %v70
  %v167 = vmul.f32 %v130, %v71
  %v168 = vmul.f32 %v135, %v72
  %v169 = vmul.f32 %v140, %v73
  %v170 = vmul.f32 %v145, %v74
  %v171 = vmul.f32 %v150, %v75
  %v172 = vmul.f32 %v155, %v76
  %v173 = vpack.c.bf16 %v158, %v157
  %v174 = vpack.c.bf16 %v160, %v159
  %v175 = vpack.c.bf16 %v162, %v161
  %v176 = vpack.c.bf16 %v164, %v163
  %v177 = vpack.c.bf16 %v166, %v165
  %v178 = vpack.c.bf16 %v168, %v167
  %v179 = vpack.c.bf16 %v170, %v169
  %v180 = vpack.c.bf16 %v172, %v171
  %v181 = vld [vmem:[#allocation2] sm:$0xff]
  %v182 = vld [vmem:[#allocation2 + $0x8] sm:$0xff]
  %v183 = vld [vmem:[#allocation2 + $0x10] sm:$0xff]
  %v184 = vld [vmem:[#allocation2 + $0x18] sm:$0xff]
  %v185 = vld [vmem:[#allocation2 + $0x20] sm:$0xff]
  %v186 = vld [vmem:[#allocation2 + $0x28] sm:$0xff]
  %v187 = vld [vmem:[#allocation2 + $0x30] sm:$0xff]
  %v188 = vld [vmem:[#allocation2 + $0x38] sm:$0xff]
  %v189 = vld [vmem:[#allocation2 + $0x40] sm:$0xff]
  %v190 = vld [vmem:[#allocation2 + $0x48] sm:$0xff]
  %v191 = vld [vmem:[#allocation2 + $0x50] sm:$0xff]
  %v192 = vld [vmem:[#allocation2 + $0x58] sm:$0xff]
  %v193 = vld [vmem:[#allocation2 + $0x60] sm:$0xff]
  %v194 = vld [vmem:[#allocation2 + $0x68] sm:$0xff]
  %v195 = vld [vmem:[#allocation2 + $0x70] sm:$0xff]
  %v196 = vld [vmem:[#allocation2 + $0x78] sm:$0xff]
  %v197 = vld [vmem:[%s0] sm:$0xf]
  %v198 = vld [vmem:[%s0 + $0x4] sm:$0xf]
  %v199 = vld [vmem:[%s0 + $0x8] sm:$0xf]
  %v200 = vld [vmem:[%s0 + $0xc] sm:$0xf]
  %v201 = vld [vmem:[%s0 + $0x10] sm:$0xf]
  %v202 = vld [vmem:[%s0 + $0x14] sm:$0xf]
  %v203 = vld [vmem:[%s0 + $0x18] sm:$0xf]
  %v204 = vld [vmem:[%s0 + $0x1c] sm:$0xf]
  %v205 = vld [vmem:[%s0 + $0x20] sm:$0xf]
  %v206 = vld [vmem:[%s0 + $0x24] sm:$0xf]
  %v207 = vld [vmem:[%s0 + $0x28] sm:$0xf]
  %v208 = vld [vmem:[%s0 + $0x2c] sm:$0xf]
  %v209 = vld [vmem:[%s0 + $0x30] sm:$0xf]
  %v210 = vld [vmem:[%s0 + $0x34] sm:$0xf]
  %v211 = vld [vmem:[%s0 + $0x38] sm:$0xf]
  %v212 = vld [vmem:[%s0 + $0x3c] sm:$0xf]
  %v229 = vunpack.c.l.b16 %v197
  %v230 = vunpack.c.l.b16 %v198
  %v231 = vunpack.c.l.b16 %v199
  %v232 = vunpack.c.l.b16 %v200
  %v233 = vunpack.c.l.b16 %v201
  %v234 = vunpack.c.l.b16 %v202
  %v235 = vunpack.c.l.b16 %v203
  %v236 = vunpack.c.l.b16 %v204
  %v237 = vunpack.c.l.b16 %v205
  %v238 = vunpack.c.l.b16 %v206
  %v239 = vunpack.c.l.b16 %v207
  %v240 = vunpack.c.l.b16 %v208
  %v241 = vunpack.c.l.b16 %v209
  %v242 = vunpack.c.l.b16 %v210
  %v243 = vunpack.c.l.b16 %v211
  %v244 = vunpack.c.l.b16 %v212
  %v245 = vpack.c.b16 %v230, %v229
  %v246 = vpack.c.b16 %v232, %v231
  %v247 = vpack.c.b16 %v234, %v233
  %v248 = vpack.c.b16 %v236, %v235
  %v249 = vpack.c.b16 %v238, %v237
  %v250 = vpack.c.b16 %v240, %v239
  %v251 = vpack.c.b16 %v242, %v241
  %v252 = vpack.c.b16 %v244, %v243
  %261 = vmatprep.subr.bf16.mxu0 0
  %262 = vmatpush1.bf16.msra.mxu0 %v173
  %263 = vmatprep.subr.bf16.mxu0 0
  %264 = vmatpush1.bf16.msra.mxu0 %v174
  %265 = vmatprep.subr.bf16.mxu0 0
  %266 = vmatpush1.bf16.msra.mxu0 %v175
  %267 = vmatprep.subr.bf16.mxu0 0
  %268 = vmatpush1.bf16.msra.mxu0 %v176
  %269 = vmatprep.subr.bf16.mxu0 0
  %270 = vmatpush1.bf16.msra.mxu0 %v177
  %271 = vmatprep.subr.bf16.mxu0 0
  %272 = vmatpush1.bf16.msra.mxu0 %v178
  %273 = vmatprep.subr.bf16.mxu0 0
  %274 = vmatpush1.bf16.msra.mxu0 %v179
  %275 = vmatprep.subr.bf16.mxu0 0
  %276 = vmatpush1.bf16.msra.mxu0 %v180
  %277 = vmatprep.subr.bf16.mxu0 0
  %278 = vmatpush1.bf16.msra.mxu0 0
  %279 = vmatprep.subr.bf16.mxu0 0
  %280 = vmatpush1.bf16.msra.mxu0 0
  %281 = vmatprep.subr.bf16.mxu0 0
  %282 = vmatpush1.bf16.msra.mxu0 0
  %283 = vmatprep.subr.bf16.mxu0 0
  %284 = vmatpush1.bf16.msra.mxu0 0
  %285 = vmatprep.subr.bf16.mxu0 0
  %286 = vmatpush1.bf16.msra.mxu0 0
  %287 = vmatprep.subr.bf16.mxu0 0
  %288 = vmatpush1.bf16.msra.mxu0 0
  %289 = vmatprep.subr.bf16.mxu0 0
  %290 = vmatpush1.bf16.msra.mxu0 0
  %291 = vmatprep.subr.bf16.mxu0 0
  %292 = vmatpush1.bf16.msra.mxu0 0
  %293 = vmatprep.mubr.bf16.mxu0 0
  %294 = vmatmul.mubr.bf16.gmra.mrb[0].mxu0 %v245
  %v295 = vpop.f32.mrb[0].mxu0
  %v296 = vadd.f32 0.0, %v295
  %v297 = vpop.f32.mrb[0].mxu0
  %v298 = vpop.f32.mrb[0].mxu0
  %v299 = vadd.f32 0.0, %v298
  %v300 = vpop.f32.mrb[0].mxu0
  %301 = vmatprep.mubr.bf16.mxu0 0
  %302 = vmatmul.mubr.bf16.gmra.mrb[0].mxu0 %v246
  %v303 = vpop.f32.mrb[0].mxu0
  %v304 = vadd.f32 0.0, %v303
  %v305 = vpop.f32.mrb[0].mxu0
  %v306 = vpop.f32.mrb[0].mxu0
  %v307 = vadd.f32 0.0, %v306
  %v308 = vpop.f32.mrb[0].mxu0
  %309 = vmatprep.mubr.bf16.mxu0 0
  %310 = vmatmul.mubr.bf16.gmra.mrb[0].mxu0 %v247
  %v311 = vpop.f32.mrb[0].mxu0
  %v312 = vadd.f32 0.0, %v311
  %v313 = vpop.f32.mrb[0].mxu0
  %v314 = vpop.f32.mrb[0].mxu0
  %v315 = vadd.f32 0.0, %v314
  %v316 = vpop.f32.mrb[0].mxu0
  %317 = vmatprep.mubr.bf16.mxu0 0
  %318 = vmatmul.mubr.bf16.gmra.mrb[0].mxu0 %v248
  %v319 = vpop.f32.mrb[0].mxu0
  %v320 = vadd.f32 0.0, %v319
  %v321 = vpop.f32.mrb[0].mxu0
  %v322 = vpop.f32.mrb[0].mxu0
  %v323 = vadd.f32 0.0, %v322
  %v324 = vpop.f32.mrb[0].mxu0
  %325 = vmatprep.mubr.bf16.mxu0 0
  %326 = vmatmul.mubr.bf16.gmra.mrb[0].mxu0 %v249
  %v327 = vpop.f32.mrb[0].mxu0
  %v328 = vadd.f32 0.0, %v327
  %v329 = vpop.f32.mrb[0].mxu0
  %v330 = vpop.f32.mrb[0].mxu0
  %v331 = vadd.f32 0.0, %v330
  %v332 = vpop.f32.mrb[0].mxu0
  %333 = vmatprep.mubr.bf16.mxu0 0
  %334 = vmatmul.mubr.bf16.gmra.mrb[0].mxu0 %v250
  %v335 = vpop.f32.mrb[0].mxu0
  %v336 = vadd.f32 0.0, %v335
  %v337 = vpop.f32.mrb[0].mxu0
  %v338 = vpop.f32.mrb[0].mxu0
  %v339 = vadd.f32 0.0, %v338
  %v340 = vpop.f32.mrb[0].mxu0
  %341 = vmatprep.mubr.bf16.mxu0 0
  %342 = vmatmul.mubr.bf16.gmra.mrb[0].mxu0 %v251
  %v343 = vpop.f32.mrb[0].mxu0
  %v344 = vadd.f32 0.0, %v343
  %v345 = vpop.f32.mrb[0].mxu0
  %v346 = vpop.f32.mrb[0].mxu0
  %v347 = vadd.f32 0.0, %v346
  %v348 = vpop.f32.mrb[0].mxu0
  %349 = vmatprep.mubr.bf16.mxu0 0
  %350 = vmatmul.mubr.bf16.gmra.mrb[0].mxu0 %v252
  %v351 = vpop.f32.mrb[0].mxu0
  %v352 = vadd.f32 0.0, %v351
  %v353 = vpop.f32.mrb[0].mxu0
  %v354 = vpop.f32.mrb[0].mxu0
  %v355 = vadd.f32 0.0, %v354
  %v356 = vpop.f32.mrb[0].mxu0
  %357 = vdwg.mxu0
  %v358 = vadd.f32 %v181, %v296
  %v359 = vadd.f32 %v182, %v299
  %v360 = vadd.f32 %v183, %v304
  %v361 = vadd.f32 %v184, %v307
  %v362 = vadd.f32 %v185, %v312
  %v363 = vadd.f32 %v186, %v315
  %v364 = vadd.f32 %v187, %v320
  %v365 = vadd.f32 %v188, %v323
  %v366 = vadd.f32 %v189, %v328
  %v367 = vadd.f32 %v190, %v331
  %v368 = vadd.f32 %v191, %v336
  %v369 = vadd.f32 %v192, %v339
  %v370 = vadd.f32 %v193, %v344
  %v371 = vadd.f32 %v194, %v347
  %v372 = vadd.f32 %v195, %v352
  %v373 = vadd.f32 %v196, %v355
  %vm374 = vcmask 130048
  %375 = vst.msk [vmem:[#allocation2] sm:$0xff] %vm374, %v358
  %376 = vst.msk [vmem:[#allocation2 + $0x8] sm:$0xff] %vm374, %v359
  %377 = vst.msk [vmem:[#allocation2 + $0x10] sm:$0xff] %vm374, %v360
  %378 = vst.msk [vmem:[#allocation2 + $0x18] sm:$0xff] %vm374, %v361
  %379 = vst.msk [vmem:[#allocation2 + $0x20] sm:$0xff] %vm374, %v362
  %380 = vst.msk [vmem:[#allocation2 + $0x28] sm:$0xff] %vm374, %v363
  %381 = vst.msk [vmem:[#allocation2 + $0x30] sm:$0xff] %vm374, %v364
  %382 = vst.msk [vmem:[#allocation2 + $0x38] sm:$0xff] %vm374, %v365
  %383 = vst.msk [vmem:[#allocation2 + $0x40] sm:$0xff] %vm374, %v366
  %384 = vst.msk [vmem:[#allocation2 + $0x48] sm:$0xff] %vm374, %v367
  %385 = vst.msk [vmem:[#allocation2 + $0x50] sm:$0xff] %vm374, %v368
  %386 = vst.msk [vmem:[#allocation2 + $0x58] sm:$0xff] %vm374, %v369
  %387 = vst.msk [vmem:[#allocation2 + $0x60] sm:$0xff] %vm374, %v370
  %388 = vst.msk [vmem:[#allocation2 + $0x68] sm:$0xff] %vm374, %v371
  %389 = vst.msk [vmem:[#allocation2 + $0x70] sm:$0xff] %vm374, %v372
  %390 = vst.msk [vmem:[#allocation2 + $0x78] sm:$0xff] %vm374, %v373
  // Predicated region
  $region30: #{tpu_custom_call.1} parent=0 // pred_check
    %p391 = pneg %p24
  $region31: #{tpu_custom_call.1} parent=0 // pred_check_branch
    %393 = sbr.rel (%p391) target = $region33
  $region32: #{tpu_custom_call.1} parent=0 // pred_region
    %v394 = vld [vmem:[#allocation2] sm:$0xff]
    %v395 = vld [vmem:[#allocation2 + $0x8] sm:$0xff]
    %v396 = vld [vmem:[#allocation2 + $0x10] sm:$0xff]
    %v397 = vld [vmem:[#allocation2 + $0x18] sm:$0xff]
    %v398 = vld [vmem:[#allocation2 + $0x20] sm:$0xff]
    %v399 = vld [vmem:[#allocation2 + $0x28] sm:$0xff]
    %v400 = vld [vmem:[#allocation2 + $0x30] sm:$0xff]
    %v401 = vld [vmem:[#allocation2 + $0x38] sm:$0xff]
    %v402 = vld [vmem:[#allocation2 + $0x40] sm:$0xff]
    %v403 = vld [vmem:[#allocation2 + $0x48] sm:$0xff]
    %v404 = vld [vmem:[#allocation2 + $0x50] sm:$0xff]
    %v405 = vld [vmem:[#allocation2 + $0x58] sm:$0xff]
    %v406 = vld [vmem:[#allocation2 + $0x60] sm:$0xff]
    %v407 = vld [vmem:[#allocation2 + $0x68] sm:$0xff]
    %v408 = vld [vmem:[#allocation2 + $0x70] sm:$0xff]
    %v409 = vld [vmem:[#allocation2 + $0x78] sm:$0xff]
    %v410 = vld [vmem:[%s4] sm:$0xff]
    %v411 = vld [vmem:[%s4 + $0x8] sm:$0xff]
    %v413 = vsel %vm374, %v394, 0
    %v416 = vsel %vm374, %v395, 0
    %v419 = vsel %vm374, %v396, 0
    %v422 = vsel %vm374, %v397, 0
    %v425 = vsel %vm374, %v398, 0
    %v428 = vsel %vm374, %v399, 0
    %v431 = vsel %vm374, %v400, 0
    %v434 = vsel %vm374, %v401, 0
    %v437 = vsel %vm374, %v402, 0
    %v440 = vsel %vm374, %v403, 0
    %v443 = vsel %vm374, %v404, 0
    %v446 = vsel %vm374, %v405, 0
    %v449 = vsel %vm374, %v406, 0
    %v452 = vsel %vm374, %v407, 0
    %v455 = vsel %vm374, %v408, 0
    %v458 = vsel %vm374, %v409, 0
    %460 = vmatprep.subr.mxu0 0.0
    %461 = vmatpush1.msra.mxu0 %v410
    %462 = vmatprep.subr.mxu0 0.0
    %463 = vmatpush1.msra.mxu0 %v411
    %464 = vmatprep.subr.mxu0 0.0
    %465 = vmatpush1.msra.mxu0 0.0
    %466 = vmatprep.subr.mxu0 0.0
    %467 = vmatpush1.msra.mxu0 0.0
    %468 = vmatprep.subr.mxu0 0.0
    %469 = vmatpush1.msra.mxu0 0.0
    %470 = vmatprep.subr.mxu0 0.0
    %471 = vmatpush1.msra.mxu0 0.0
    %472 = vmatprep.subr.mxu0 0.0
    %473 = vmatpush1.msra.mxu0 0.0
    %474 = vmatprep.subr.mxu0 0.0
    %475 = vmatpush1.msra.mxu0 0.0
    %476 = vmatprep.subr.mxu0 0.0
    %477 = vmatpush1.msra.mxu0 0.0
    %478 = vmatprep.subr.mxu0 0.0
    %479 = vmatpush1.msra.mxu0 0.0
    %480 = vmatprep.subr.mxu0 0.0
    %481 = vmatpush1.msra.mxu0 0.0
    %482 = vmatprep.subr.mxu0 0.0
    %483 = vmatpush1.msra.mxu0 0.0
    %484 = vmatprep.subr.mxu0 0.0
    %485 = vmatpush1.msra.mxu0 0.0
    %486 = vmatprep.subr.mxu0 0.0
    %487 = vmatpush1.msra.mxu0 0.0
    %488 = vmatprep.subr.mxu0 0.0
    %489 = vmatpush1.msra.mxu0 0.0
    %490 = vmatprep.subr.mxu0 0.0
    %491 = vmatpush1.msra.mxu0 0.0
    %492 = vmatprep.subr.mxu0 0.0
    %493 = vmatpush1.msra.mxu0 0.0
    %494 = vmatprep.subr.mxu0 0.0
    %495 = vmatpush1.msra.mxu0 0.0
    %496 = vmatprep.subr.mxu0 0.0
    %497 = vmatpush1.msra.mxu0 0.0
    %498 = vmatprep.subr.mxu0 0.0
    %499 = vmatpush1.msra.mxu0 0.0
    %500 = vmatprep.subr.mxu0 0.0
    %501 = vmatpush1.msra.mxu0 0.0
    %502 = vmatprep.subr.mxu0 0.0
    %503 = vmatpush1.msra.mxu0 0.0
    %504 = vmatprep.subr.mxu0 0.0
    %505 = vmatpush1.msra.mxu0 0.0
    %506 = vmatprep.subr.mxu0 0.0
    %507 = vmatpush1.msra.mxu0 0.0
    %508 = vmatprep.subr.mxu0 0.0
    %509 = vmatpush1.msra.mxu0 0.0
    %510 = vmatprep.subr.mxu0 0.0
    %511 = vmatpush1.msra.mxu0 0.0
    %512 = vmatprep.subr.mxu0 0.0
    %513 = vmatpush1.msra.mxu0 0.0
    %514 = vmatprep.subr.mxu0 0.0
    %515 = vmatpush1.msra.mxu0 0.0
    %516 = vmatprep.subr.mxu0 0.0
    %517 = vmatpush1.msra.mxu0 0.0
    %518 = vmatprep.subr.mxu0 0.0
    %519 = vmatpush1.msra.mxu0 0.0
    %520 = vmatprep.subr.mxu0 0.0
    %521 = vmatpush1.msra.mxu0 0.0
    %522 = vmatprep.subr.mxu0 0.0
    %523 = vmatpush1.msra.mxu0 0.0
    %524 = vmatprep.mubr.f32.mxu0 0.0
    %525 = vmatmul.mubr.f32.gmra.mrb[0].mxu0 %v413
    %v526 = vpop.f32.mrb[0].mxu0
    %v527 = vadd.f32 0.0, %v526
    %v528 = vpop.f32.mrb[0].mxu0
    %529 = vmatprep.mubr.f32.mxu0 0.0
    %530 = vmatmul.mubr.f32.gmra.mrb[0].mxu0 %v416
    %v531 = vpop.f32.mrb[0].mxu0
    %v532 = vadd.f32 0.0, %v531
    %v533 = vpop.f32.mrb[0].mxu0
    %534 = vmatprep.mubr.f32.mxu0 0.0
    %535 = vmatmul.mubr.f32.gmra.mrb[0].mxu0 %v419
    %v536 = vpop.f32.mrb[0].mxu0
    %v537 = vadd.f32 0.0, %v536
    %v538 = vpop.f32.mrb[0].mxu0
    %539 = vmatprep.mubr.f32.mxu0 0.0
    %540 = vmatmul.mubr.f32.gmra.mrb[0].mxu0 %v422
    %v541 = vpop.f32.mrb[0].mxu0
    %v542 = vadd.f32 0.0, %v541
    %v543 = vpop.f32.mrb[0].mxu0
    %544 = vmatprep.mubr.f32.mxu0 0.0
    %545 = vmatmul.mubr.f32.gmra.mrb[0].mxu0 %v425
    %v546 = vpop.f32.mrb[0].mxu0
    %v547 = vadd.f32 0.0, %v546
    %v548 = vpop.f32.mrb[0].mxu0
    %549 = vmatprep.mubr.f32.mxu0 0.0
    %550 = vmatmul.mubr.f32.gmra.mrb[0].mxu0 %v428
    %v551 = vpop.f32.mrb[0].mxu0
    %v552 = vadd.f32 0.0, %v551
    %v553 = vpop.f32.mrb[0].mxu0
    %554 = vmatprep.mubr.f32.mxu0 0.0
    %555 = vmatmul.mubr.f32.gmra.mrb[0].mxu0 %v431
    %v556 = vpop.f32.mrb[0].mxu0
    %v557 = vadd.f32 0.0, %v556
    %v558 = vpop.f32.mrb[0].mxu0
    %559 = vmatprep.mubr.f32.mxu0 0.0
    %560 = vmatmul.mubr.f32.gmra.mrb[0].mxu0 %v434
    %v561 = vpop.f32.mrb[0].mxu0
    %v562 = vadd.f32 0.0, %v561
    %v563 = vpop.f32.mrb[0].mxu0
    %564 = vmatprep.mubr.f32.mxu0 0.0
    %565 = vmatmul.mubr.f32.gmra.mrb[0].mxu0 %v437
    %v566 = vpop.f32.mrb[0].mxu0
    %v567 = vadd.f32 0.0, %v566
    %v568 = vpop.f32.mrb[0].mxu0
    %569 = vmatprep.mubr.f32.mxu0 0.0
    %570 = vmatmul.mubr.f32.gmra.mrb[0].mxu0 %v440
    %v571 = vpop.f32.mrb[0].mxu0
    %v572 = vadd.f32 0.0, %v571
    %v573 = vpop.f32.mrb[0].mxu0
    %574 = vmatprep.mubr.f32.mxu0 0.0
    %575 = vmatmul.mubr.f32.gmra.mrb[0].mxu0 %v443
    %v576 = vpop.f32.mrb[0].mxu0
    %v577 = vadd.f32 0.0, %v576
    %v578 = vpop.f32.mrb[0].mxu0
    %579 = vmatprep.mubr.f32.mxu0 0.0
    %580 = vmatmul.mubr.f32.gmra.mrb[0].mxu0 %v446
    %v581 = vpop.f32.mrb[0].mxu0
    %v582 = vadd.f32 0.0, %v581
    %v583 = vpop.f32.mrb[0].mxu0
    %584 = vmatprep.mubr.f32.mxu0 0.0
    %585 = vmatmul.mubr.f32.gmra.mrb[0].mxu0 %v449
    %v586 = vpop.f32.mrb[0].mxu0
    %v587 = vadd.f32 0.0, %v586
    %v588 = vpop.f32.mrb[0].mxu0
    %589 = vmatprep.mubr.f32.mxu0 0.0
    %590 = vmatmul.mubr.f32.gmra.mrb[0].mxu0 %v452
    %v591 = vpop.f32.mrb[0].mxu0
    %v592 = vadd.f32 0.0, %v591
    %v593 = vpop.f32.mrb[0].mxu0
    %594 = vmatprep.mubr.f32.mxu0 0.0
    %595 = vmatmul.mubr.f32.gmra.mrb[0].mxu0 %v455
    %v596 = vpop.f32.mrb[0].mxu0
    %v597 = vadd.f32 0.0, %v596
    %v598 = vpop.f32.mrb[0].mxu0
    %599 = vmatprep.mubr.f32.mxu0 0.0
    %600 = vmatmul.mubr.f32.gmra.mrb[0].mxu0 %v458
    %v601 = vpop.f32.mrb[0].mxu0
    %v602 = vadd.f32 0.0, %v601
    %v603 = vpop.f32.mrb[0].mxu0
    %604 = vdwg.mxu0
    %v605 = vld [vmem:[%s3] sm:$0xff]
    %v606 = vld [vmem:[%s3 + $0x8] sm:$0xff]
    %v607 = vld [vmem:[%s3 + $0x10] sm:$0xff]
    %v608 = vld [vmem:[%s3 + $0x18] sm:$0xff]
    %v609 = vld [vmem:[%s3 + $0x20] sm:$0xff]
    %v610 = vld [vmem:[%s3 + $0x28] sm:$0xff]
    %v611 = vld [vmem:[%s3 + $0x30] sm:$0xff]
    %v612 = vld [vmem:[%s3 + $0x38] sm:$0xff]
    %v613 = vld [vmem:[%s3 + $0x40] sm:$0xff]
    %v614 = vld [vmem:[%s3 + $0x48] sm:$0xff]
    %v615 = vld [vmem:[%s3 + $0x50] sm:$0xff]
    %v616 = vld [vmem:[%s3 + $0x58] sm:$0xff]
    %v617 = vld [vmem:[%s3 + $0x60] sm:$0xff]
    %v618 = vld [vmem:[%s3 + $0x68] sm:$0xff]
    %v619 = vld [vmem:[%s3 + $0x70] sm:$0xff]
    %v620 = vld [vmem:[%s3 + $0x78] sm:$0xff]
    %622 = vset.pattern.permute.xlu0 0
    %623 = vperm.xlu0 %622, %v605
    %v624 = vpop.permute.xlu0 %623
    %627 = vset.pattern.permute.xlu0 0
    %628 = vperm.xlu0 %627, %v606
    %v629 = vpop.permute.xlu0 %628
    %632 = vset.pattern.permute.xlu0 0
    %633 = vperm.xlu0 %632, %v607
    %v634 = vpop.permute.xlu0 %633
    %637 = vset.pattern.permute.xlu0 0
    %638 = vperm.xlu0 %637, %v608
    %v639 = vpop.permute.xlu0 %638
    %642 = vset.pattern.permute.xlu0 0
    %643 = vperm.xlu0 %642, %v609
    %v644 = vpop.permute.xlu0 %643
    %647 = vset.pattern.permute.xlu0 0
    %648 = vperm.xlu0 %647, %v610
    %v649 = vpop.permute.xlu0 %648
    %652 = vset.pattern.permute.xlu0 0
    %653 = vperm.xlu0 %652, %v611
    %v654 = vpop.permute.xlu0 %653
    %657 = vset.pattern.permute.xlu0 0
    %658 = vperm.xlu0 %657, %v612
    %v659 = vpop.permute.xlu0 %658
    %662 = vset.pattern.permute.xlu0 0
    %663 = vperm.xlu0 %662, %v613
    %v664 = vpop.permute.xlu0 %663
    %667 = vset.pattern.permute.xlu0 0
    %668 = vperm.xlu0 %667, %v614
    %v669 = vpop.permute.xlu0 %668
    %672 = vset.pattern.permute.xlu0 0
    %673 = vperm.xlu0 %672, %v615
    %v674 = vpop.permute.xlu0 %673
    %677 = vset.pattern.permute.xlu0 0
    %678 = vperm.xlu0 %677, %v616
    %v679 = vpop.permute.xlu0 %678
    %682 = vset.pattern.permute.xlu0 0
    %683 = vperm.xlu0 %682, %v617
    %v684 = vpop.permute.xlu0 %683
    %687 = vset.pattern.permute.xlu0 0
    %688 = vperm.xlu0 %687, %v618
    %v689 = vpop.permute.xlu0 %688
    %692 = vset.pattern.permute.xlu0 0
    %693 = vperm.xlu0 %692, %v619
    %v694 = vpop.permute.xlu0 %693
    %697 = vset.pattern.permute.xlu0 0
    %698 = vperm.xlu0 %697, %v620
    %v699 = vpop.permute.xlu0 %698
    %v701 = vmul.f32 %v624, %v527
    %v702 = vmul.f32 %v629, %v532
    %v703 = vmul.f32 %v634, %v537
    %v704 = vmul.f32 %v639, %v542
    %v705 = vmul.f32 %v644, %v547
    %v706 = vmul.f32 %v649, %v552
    %v707 = vmul.f32 %v654, %v557
    %v708 = vmul.f32 %v659, %v562
    %v709 = vmul.f32 %v664, %v567
    %v710 = vmul.f32 %v669, %v572
    %v711 = vmul.f32 %v674, %v577
    %v712 = vmul.f32 %v679, %v582
    %v713 = vmul.f32 %v684, %v587
    %v714 = vmul.f32 %v689, %v592
    %v715 = vmul.f32 %v694, %v597
    %v716 = vmul.f32 %v699, %v602
    %v717 = vld [vmem:[%s5] sm:$0x1]
    %v719 = vlaneseq
    %v720 = vshrl.u32 %v719, 7
    %v721 = vsub.s32 0, %v720
    %v722 = vrot.slane %v717, %v721
    %v724 = vadd.f32 %v701, %v722
    %v725 = vadd.f32 %v702, %v722
    %v726 = vadd.f32 %v703, %v722
    %v727 = vadd.f32 %v704, %v722
    %v728 = vadd.f32 %v705, %v722
    %v729 = vadd.f32 %v706, %v722
    %v730 = vadd.f32 %v707, %v722
    %v731 = vadd.f32 %v708, %v722
    %v732 = vadd.f32 %v709, %v722
    %v733 = vadd.f32 %v710, %v722
    %v734 = vadd.f32 %v711, %v722
    %v735 = vadd.f32 %v712, %v722
    %v736 = vadd.f32 %v713, %v722
    %v737 = vadd.f32 %v714, %v722
    %v738 = vadd.f32 %v715, %v722
    %v739 = vadd.f32 %v716, %v722
    %v740 = vmax.f32 %v724, 0.0
    %v741 = vmax.f32 %v725, 0.0
    %v742 = vmax.f32 %v726, 0.0
    %v743 = vmax.f32 %v727, 0.0
    %v744 = vmax.f32 %v728, 0.0
    %v745 = vmax.f32 %v729, 0.0
    %v746 = vmax.f32 %v730, 0.0
    %v747 = vmax.f32 %v731, 0.0
    %v748 = vmax.f32 %v732, 0.0
    %v749 = vmax.f32 %v733, 0.0
    %v750 = vmax.f32 %v734, 0.0
    %v751 = vmax.f32 %v735, 0.0
    %v752 = vmax.f32 %v736, 0.0
    %v753 = vmax.f32 %v737, 0.0
    %v754 = vmax.f32 %v738, 0.0
    %v755 = vmax.f32 %v739, 0.0
    %vm756 = vcmask 261120
    %757 = vst.msk [vmem:[%s6] sm:$0xff] %vm756, %v740
    %758 = vst.msk [vmem:[%s6 + $0x8] sm:$0xff] %vm756, %v741
    %759 = vst.msk [vmem:[%s6 + $0x10] sm:$0xff] %vm756, %v742
    %760 = vst.msk [vmem:[%s6 + $0x18] sm:$0xff] %vm756, %v743
    %761 = vst.msk [vmem:[%s6 + $0x20] sm:$0xff] %vm756, %v744
    %762 = vst.msk [vmem:[%s6 + $0x28] sm:$0xff] %vm756, %v745
    %763 = vst.msk [vmem:[%s6 + $0x30] sm:$0xff] %vm756, %v746
    %764 = vst.msk [vmem:[%s6 + $0x38] sm:$0xff] %vm756, %v747
    %765 = vst.msk [vmem:[%s6 + $0x40] sm:$0xff] %vm756, %v748
    %766 = vst.msk [vmem:[%s6 + $0x48] sm:$0xff] %vm756, %v749
    %767 = vst.msk [vmem:[%s6 + $0x50] sm:$0xff] %vm756, %v750
    %768 = vst.msk [vmem:[%s6 + $0x58] sm:$0xff] %vm756, %v751
    %769 = vst.msk [vmem:[%s6 + $0x60] sm:$0xff] %vm756, %v752
    %770 = vst.msk [vmem:[%s6 + $0x68] sm:$0xff] %vm756, %v753
    %771 = vst.msk [vmem:[%s6 + $0x70] sm:$0xff] %vm756, %v754
    %772 = vst.msk [vmem:[%s6 + $0x78] sm:$0xff] %vm756, %v755
  $region33: #{tpu_custom_call.1} parent=0 // pred_fallthru
    _
  // Predicated region
  $region34: #{tpu_custom_call.1} parent=0 // pred_check
    _
  $region35: #{tpu_custom_call.1} parent=0 // pred_check_branch
    %774 = sbr.rel (0) target = $region37
  $region36: #{tpu_custom_call.1} parent=0 // pred_region
    _
  $region37: #{tpu_custom_call.1} parent=0 // pred_fallthru
    _
  // Predicated region
  $region38: #{tpu_custom_call.1} parent=0 // pred_check
    _
  $region39: #{tpu_custom_call.1} parent=0 // pred_check_branch
    %776 = sbr.rel (0) target = $region41
  $region40: #{tpu_custom_call.1} parent=0 // pred_region
    _
  $region41: #{tpu_custom_call.1} parent=0 // pred_fallthru
    _

</llo_original>
